<compile_context>
chip_gen: v6e
topology: v6e:2x2x1
jax: 0.10.0
libtpu: 0.0.40
codegen_flags: <defaults>
</compile_context>

<pallas_src>
import math

import jax
import jax.numpy as jnp
from jax.experimental import pallas as pl
from jax.experimental.pallas import tpu as pltpu


def _mlp_kernel(x_ref, w1t_ref, b1_ref, w2t_ref, b2_ref, w3t_ref, b3_ref, o_ref):
    # x_ref:   (tile_b, D)  f32    -> cast to bf16 + transposed in-kernel
    # w1t_ref: (64, D)  bf16       b1_ref: (64, 1) f32
    # w2t_ref: (32, 64) bf16       b2_ref: (32, 1) f32
    # w3t_ref: (1, 32)  bf16       b3_ref: (1, 1)  f32
    # o_ref:   (1, tile_b) f32     (lane-dense batch row for this tile)
    xt = x_ref[...].T.astype(jnp.bfloat16)               # (D, tile_b): one XLU transpose

    h1t = jnp.dot(w1t_ref[...], xt,
                  preferred_element_type=jnp.float32) + b1_ref[...]   # (64, tile_b)
    h1t = jnp.maximum(h1t, 0.0)                                       # ReLU (f32)

    h2t = jnp.dot(w2t_ref[...], h1t.astype(jnp.bfloat16),
                  preferred_element_type=jnp.float32) + b2_ref[...]   # (32, tile_b)
    h2t = jnp.maximum(h2t, 0.0)                                       # ReLU (f32)

    logits = jnp.dot(w3t_ref[...], h2t.astype(jnp.bfloat16),
                     preferred_element_type=jnp.float32) + b3_ref[...]  # (1, tile_b)
    o_ref[...] = jax.nn.sigmoid(logits).astype(o_ref.dtype)


def _round_up(n, m):
    return ((n + m - 1) // m) * m


def _choose_tile_b(B, tile_b_max):
    """Batch tile: always a multiple of 128 (lane-dense output stores), as large as
    allowed, but keeping >=2 grid steps when possible (v7x has 2 TensorCores)."""
    tile_b_max = max(128, (tile_b_max // 128) * 128)     # enforce 128-multiple explicitly
    b128 = _round_up(B, 128)
    tile_b = min(tile_b_max, b128)
    if b128 // tile_b < 2 and b128 >= 2 * 128:
        tile_b = max(128, 128 * ((b128 // 128) // 2))
    return tile_b


def mlp_forward(x, params, *, tile_b_max=4096):
    """x: (B, input_dim) float32; params: dict of w1,b1,w2,b2,w3,b3 (weights (in,out))."""
    B, D = x.shape
    tile_b = _choose_tile_b(B, tile_b_max)
    b_pad = _round_up(B, tile_b)
    num_tiles = b_pad // tile_b

    # x goes in as f32 untouched (bf16 cast lives inside the kernel). Only a ragged
    # tail pays a zero-pad pass; padded rows are sliced off at the end.
    x_in = x.astype(jnp.float32)
    if b_pad != B:
        x_in = jnp.pad(x_in, ((0, b_pad - B), (0, 0)))

    # Tiny weights: pre-transpose to feature-major (out, in) bf16; biases stay f32
    # as (out, 1) columns so they broadcast over the lane (batch) dimension.
    w1t = params["w1"].T.astype(jnp.bfloat16)            # (64, D)
    w2t = params["w2"].T.astype(jnp.bfloat16)            # (32, 64)
    w3t = params["w3"].T.astype(jnp.bfloat16)            # (1, 32)
    b1 = params["b1"].reshape(-1, 1).astype(jnp.float32)  # (64, 1)
    b2 = params["b2"].reshape(-1, 1).astype(jnp.float32)  # (32, 1)
    b3 = params["b3"].reshape(-1, 1).astype(jnp.float32)  # (1, 1)

    const = lambda i: (0, 0)                              # weights resident across tiles
    weight_bytes = sum(int(a.size) * a.dtype.itemsize
                       for a in (w1t, b1, w2t, b2, w3t, b3))
    cost = pl.CostEstimate(
        flops=2 * b_pad * (D * 64 + 64 * 32 + 32 * 1),
        transcendentals=2 * b_pad,                        # sigmoid: exp + reciprocal / row
        bytes_accessed=b_pad * D * 4 + b_pad * 4 + weight_bytes,
    )

    out = pl.pallas_call(
        _mlp_kernel,
        out_shape=jax.ShapeDtypeStruct((1, b_pad), jnp.float32),
        grid=(num_tiles,),
        in_specs=[
            pl.BlockSpec((tile_b, D), lambda i: (i, 0)),  # x: pipelined per batch tile
            pl.BlockSpec(w1t.shape, const),
            pl.BlockSpec(b1.shape, const),
            pl.BlockSpec(w2t.shape, const),
            pl.BlockSpec(b2.shape, const),
            pl.BlockSpec(w3t.shape, const),
            pl.BlockSpec(b3.shape, const),
        ],
        out_specs=pl.BlockSpec((1, tile_b), lambda i: (0, i)),
        compiler_params=pltpu.CompilerParams(
            dimension_semantics=("parallel",),            # megacore on v7x
            vmem_limit_bytes=32 * 1024 * 1024,            # safe on v5e/v6e/v7x
        ),
        cost_estimate=cost,
    )(x_in, w1t, b1, w2t, b2, w3t, b3)

    # (1, b_pad) is batch order along lanes; reshape to a column and drop padding.
    return out.reshape(b_pad, 1)[:B]


def init_params(key, input_dim):
    """Deterministic init mirroring PyTorch nn.Linear default:
    U(-1/sqrt(fan_in), 1/sqrt(fan_in)). Weights stored as (in, out)."""
    dims = [(input_dim, 64), (64, 32), (32, 1)]
    params = {}
    for idx, (fan_in, fan_out) in enumerate(dims, start=1):
        key, kw, kb = jax.random.split(key, 3)
        bound = 1.0 / math.sqrt(fan_in)
        params[f"w{idx}"] = jax.random.uniform(
            kw, (fan_in, fan_out), jnp.float32, minval=-bound, maxval=bound)
        params[f"b{idx}"] = jax.random.uniform(
            kb, (1, fan_out), jnp.float32, minval=-bound, maxval=bound)
    return params


def mlp_reference(x, params):
    """Pure-JAX reference mirroring the kernel's bf16-operand / f32-accumulate numerics."""
    f = lambda a: a.astype(jnp.bfloat16).astype(jnp.float32)
    h1 = jnp.maximum(jnp.dot(f(x), f(params["w1"]),
                             preferred_element_type=jnp.float32) + params["b1"], 0.0)
    h2 = jnp.maximum(jnp.dot(f(h1), f(params["w2"]),
                             preferred_element_type=jnp.float32) + params["b2"], 0.0)
    logits = jnp.dot(f(h2), f(params["w3"]),
                     preferred_element_type=jnp.float32) + params["b3"]
    return jax.nn.sigmoid(logits)


if __name__ == "__main__":
    key = jax.random.PRNGKey(0)
    key, kx, kp, kx2 = jax.random.split(key, 4)

    batch, input_dim = 8, 16
    x = jax.random.normal(kx, (batch, input_dim), jnp.float32)
    params = init_params(kp, input_dim)

    out = jax.block_until_ready(mlp_forward(x, params))
    ref = mlp_reference(x, params)
    assert out.shape == (batch, 1)
    assert jnp.allclose(out, ref, atol=2e-3, rtol=2e-3)

    # Multi-tile + ragged-tail check: 300 rows -> 3 tiles of 128 (also exercises the
    # >=2-grid-step path used for v7x's two TensorCores) + zero-padded tail.
    x2 = jax.random.normal(kx2, (300, input_dim), jnp.float32)
    out2 = jax.block_until_ready(mlp_forward(x2, params))
    ref2 = mlp_reference(x2, params)
    assert out2.shape == (300, 1)
    assert jnp.allclose(out2, ref2, atol=2e-3, rtol=2e-3)

    print("KERNEL_OK")
</pallas_src>

<mosaic_0001>
module attributes {stable_mosaic.version = 11 : i64} {
  func.func @_mlp_kernel(%arg0: i32, %arg1: memref<128x16xf32, #tpu.memory_space<vmem>>, %arg2: memref<64x16xbf16, #tpu.memory_space<vmem>>, %arg3: memref<64x1xf32, #tpu.memory_space<vmem>>, %arg4: memref<32x64xbf16, #tpu.memory_space<vmem>>, %arg5: memref<32x1xf32, #tpu.memory_space<vmem>>, %arg6: memref<1x32xbf16, #tpu.memory_space<vmem>>, %arg7: memref<1x1xf32, #tpu.memory_space<vmem>>, %arg8: memref<1x128xf32, #tpu.memory_space<vmem>>) attributes {dimension_semantics = [#tpu.dimension_semantics<parallel>], iteration_bounds = array<i64: 1>, scalar_prefetch = 0 : i64, scratch_operands = 0 : i64, tpu.core_type = #tpu.core_type<tc>, window_params = [{transform_indices = @transform_0, window_bounds = array<i64: 128, 16>}, {pipeline_mode = #tpu.pipeline_mode<synchronous>, transform_indices = @transform_1, window_bounds = array<i64: 64, 16>}, {pipeline_mode = #tpu.pipeline_mode<synchronous>, transform_indices = @transform_2, window_bounds = array<i64: 64, 1>}, {pipeline_mode = #tpu.pipeline_mode<synchronous>, transform_indices = @transform_3, window_bounds = array<i64: 32, 64>}, {pipeline_mode = #tpu.pipeline_mode<synchronous>, transform_indices = @transform_4, window_bounds = array<i64: 32, 1>}, {pipeline_mode = #tpu.pipeline_mode<synchronous>, transform_indices = @transform_5, window_bounds = array<i64: 1, 32>}, {pipeline_mode = #tpu.pipeline_mode<synchronous>, transform_indices = @transform_6, window_bounds = array<i64: 1, 1>}, {transform_indices = @transform_7, window_bounds = array<i64: 1, 128>}]} {
    %c0 = arith.constant 0 : index
    %c0_0 = arith.constant 0 : index
    %0 = vector.load %arg1[%c0, %c0_0] : memref<128x16xf32, #tpu.memory_space<vmem>>, vector<128x16xf32>
    %1 = tpu.transpose %0, [1, 0] : vector<128x16xf32> -> vector<16x128xf32>
    %2 = arith.truncf %1 : vector<16x128xf32> to vector<16x128xbf16>
    %c0_1 = arith.constant 0 : index
    %c0_2 = arith.constant 0 : index
    %3 = vector.load %arg2[%c0_1, %c0_2] : memref<64x16xbf16, #tpu.memory_space<vmem>>, vector<64x16xbf16>
    %cst = arith.constant dense<0.000000e+00> : vector<64x128xf32>
    %4 = tpu.matmul %3, %2, %cst {dimension_numbers = #tpu.dot_dimension_numbers<[1], [0], [0], [1], [0, 0, 1, 1], [], []>} : vector<64x16xbf16>, vector<16x128xbf16>, vector<64x128xf32> -> vector<64x128xf32>
    %c0_3 = arith.constant 0 : index
    %c0_4 = arith.constant 0 : index
    %5 = vector.load %arg3[%c0_3, %c0_4] : memref<64x1xf32, #tpu.memory_space<vmem>>, vector<64x1xf32>
    %6 = vector.broadcast %5 : vector<64x1xf32> to vector<64x128xf32>
    %7 = arith.addf %4, %6 : vector<64x128xf32>
    %cst_5 = arith.constant 0.000000e+00 : f32
    %8 = vector.broadcast %cst_5 : f32 to vector<64x128xf32>
    %9 = arith.maximumf %7, %8 : vector<64x128xf32>
    %c0_6 = arith.constant 0 : index
    %c0_7 = arith.constant 0 : index
    %10 = vector.load %arg4[%c0_6, %c0_7] : memref<32x64xbf16, #tpu.memory_space<vmem>>, vector<32x64xbf16>
    %11 = arith.truncf %9 : vector<64x128xf32> to vector<64x128xbf16>
    %cst_8 = arith.constant dense<0.000000e+00> : vector<32x128xf32>
    %12 = tpu.matmul %10, %11, %cst_8 {dimension_numbers = #tpu.dot_dimension_numbers<[1], [0], [0], [1], [0, 0, 1, 1], [], []>} : vector<32x64xbf16>, vector<64x128xbf16>, vector<32x128xf32> -> vector<32x128xf32>
    %c0_9 = arith.constant 0 : index
    %c0_10 = arith.constant 0 : index
    %13 = vector.load %arg5[%c0_9, %c0_10] : memref<32x1xf32, #tpu.memory_space<vmem>>, vector<32x1xf32>
    %14 = vector.broadcast %13 : vector<32x1xf32> to vector<32x128xf32>
    %15 = arith.addf %12, %14 : vector<32x128xf32>
    %cst_11 = arith.constant 0.000000e+00 : f32
    %16 = vector.broadcast %cst_11 : f32 to vector<32x128xf32>
    %17 = arith.maximumf %15, %16 : vector<32x128xf32>
    %c0_12 = arith.constant 0 : index
    %c0_13 = arith.constant 0 : index
    %18 = vector.load %arg6[%c0_12, %c0_13] : memref<1x32xbf16, #tpu.memory_space<vmem>>, vector<1x32xbf16>
    %19 = arith.truncf %17 : vector<32x128xf32> to vector<32x128xbf16>
    %cst_14 = arith.constant dense<0.000000e+00> : vector<1x128xf32>
    %20 = tpu.matmul %18, %19, %cst_14 {dimension_numbers = #tpu.dot_dimension_numbers<[1], [0], [0], [1], [0, 0, 1, 1], [], []>} : vector<1x32xbf16>, vector<32x128xbf16>, vector<1x128xf32> -> vector<1x128xf32>
    %c0_15 = arith.constant 0 : index
    %c0_16 = arith.constant 0 : index
    %21 = vector.load %arg7[%c0_15, %c0_16] : memref<1x1xf32, #tpu.memory_space<vmem>>, vector<1x1xf32>
    %22 = vector.broadcast %21 : vector<1x1xf32> to vector<1x128xf32>
    %23 = arith.addf %20, %22 : vector<1x128xf32>
    %24 = arith.negf %23 : vector<1x128xf32>
    %25 = math.exp %24 : vector<1x128xf32>
    %cst_17 = arith.constant 1.000000e+00 : f32
    %26 = vector.broadcast %cst_17 : f32 to vector<1x128xf32>
    %27 = arith.addf %26, %25 : vector<1x128xf32>
    %28 = arith.divf %26, %27 : vector<1x128xf32>
    %c0_18 = arith.constant 0 : index
    %c0_19 = arith.constant 0 : index
    %29 = vector.load %arg8[%c0_18, %c0_19] : memref<1x128xf32, #tpu.memory_space<vmem>>, vector<1x128xf32>
    tpu.vector_store %arg8[%c0_18, %c0_19], %28 {strides = array<i32>} : memref<1x128xf32, #tpu.memory_space<vmem>>, vector<1x128xf32>,
    return
  }
  func.func @transform_0(%arg0: i32) -> (i32, i32) {
    %c0_i32 = arith.constant 0 : i32
    %c0_i32_0 = arith.constant 0 : i32
    return %arg0, %c0_i32 : i32, i32
  }
  func.func @transform_1(%arg0: i32) -> (i32, i32) {
    %c0_i32 = arith.constant 0 : i32
    %c0_i32_0 = arith.constant 0 : i32
    %c0_i32_1 = arith.constant 0 : i32
    return %c0_i32, %c0_i32_0 : i32, i32
  }
  func.func @transform_2(%arg0: i32) -> (i32, i32) {
    %c0_i32 = arith.constant 0 : i32
    %c0_i32_0 = arith.constant 0 : i32
    %c0_i32_1 = arith.constant 0 : i32
    return %c0_i32, %c0_i32_0 : i32, i32
  }
  func.func @transform_3(%arg0: i32) -> (i32, i32) {
    %c0_i32 = arith.constant 0 : i32
    %c0_i32_0 = arith.constant 0 : i32
    %c0_i32_1 = arith.constant 0 : i32
    return %c0_i32, %c0_i32_0 : i32, i32
  }
  func.func @transform_4(%arg0: i32) -> (i32, i32) {
    %c0_i32 = arith.constant 0 : i32
    %c0_i32_0 = arith.constant 0 : i32
    %c0_i32_1 = arith.constant 0 : i32
    return %c0_i32, %c0_i32_0 : i32, i32
  }
  func.func @transform_5(%arg0: i32) -> (i32, i32) {
    %c0_i32 = arith.constant 0 : i32
    %c0_i32_0 = arith.constant 0 : i32
    %c0_i32_1 = arith.constant 0 : i32
    return %c0_i32, %c0_i32_0 : i32, i32
  }
  func.func @transform_6(%arg0: i32) -> (i32, i32) {
    %c0_i32 = arith.constant 0 : i32
    %c0_i32_0 = arith.constant 0 : i32
    %c0_i32_1 = arith.constant 0 : i32
    return %c0_i32, %c0_i32_0 : i32, i32
  }
  func.func @transform_7(%arg0: i32) -> (i32, i32) {
    %c0_i32 = arith.constant 0 : i32
    %c0_i32_0 = arith.constant 0 : i32
    return %c0_i32, %arg0 : i32, i32
  }
}

</mosaic_0001>

<llo_original>
// kernel: tpu_custom_call.1
$region0: #{tpu_custom_call.1}
  #allocation0 [shape = 'u32[]', space=smem, size = 0x4, offset = 0x4, fixed_abs, tag = 'smem constant byte address 0x4 - core index']
  #allocation1 [shape = 'u32[144,128]{1,0:T(1,128)}', space=vmem, size = 0x12000, scoped, tag = 'internal scratch']
  #allocation2 [shape = 'f32[1,1]{1,0:T(1,128)S(1)}', space=vmem, size = 0x200, scoped, tag = 'scoped memory for tpu_custom_call.1']
  %s0 = inlined_call_operand.vmem [shape: f32[128,16], index: 0, kind: input, shape index: {}]
  %s1 = inlined_call_operand.vmem [shape: bf16[64,16], index: 1, kind: input, shape index: {}]
  %s2 = inlined_call_operand.vmem [shape: f32[64,1], index: 2, kind: input, shape index: {}]
  %s3 = inlined_call_operand.vmem [shape: bf16[32,64], index: 3, kind: input, shape index: {}]
  %s4 = inlined_call_operand.vmem [shape: f32[32,1], index: 4, kind: input, shape index: {}]
  %s5 = inlined_call_operand.vmem [shape: bf16[1,32], index: 5, kind: input, shape index: {}]
  %s6 = inlined_call_operand.<no memory space> [shape: f32[1,1], index: 6, kind: input, shape index: {}]
  %s7 = inlined_call_operand.hbm [shape: f32[1,128], index: 7, kind: output, shape index: {}]
  %s8 = sld [smem:[#allocation0]]
  $region38: #{tpu_custom_call.1} parent=0
    _
  %s10 = ssub.s32 1, %s8
  %s11 = scalar_select 0, %s10, %s8
  %v12 = vstv %s6
  %13 = vst [vmem:[#allocation2] sm:$0x1] %v12
  $region1: #{tpu_custom_call.1} parent=0
    #allocation3 [shape = 'u8[512]{0}', space=vmem, size = 0x400, scoped, tag = 'output window, operand 0, single buffered']
    #allocation4 [shape = 's32[1]{0}', space=sflag, size = 0x4, scoped, tag = 'scoped memory for tpu_custom_call.1']
    %14 = vsyncpa [#allocation4], 0
    // Predicated region
    $region2: #{tpu_custom_call.1} parent=1 // pred_check
      _
    $region3: #{tpu_custom_call.1} parent=1 // pred_check_branch
      %16 = sbr.rel (0) target = $region5
    $region4: #{tpu_custom_call.1} parent=1 // pred_region
      _
    $region5: #{tpu_custom_call.1} parent=1 // pred_fallthru
      _
    // Predicated region
    $region6: #{tpu_custom_call.1} parent=1 // pred_check
      _
    $region7: #{tpu_custom_call.1} parent=1 // pred_check_branch
      %18 = sbr.rel (0) target = $region9
    $region8: #{tpu_custom_call.1} parent=1 // pred_region
      _
    $region9: #{tpu_custom_call.1} parent=1 // pred_fallthru
      _
    // Predicated region
    $region10: #{tpu_custom_call.1} parent=1 // pred_check
      _
    $region11: #{tpu_custom_call.1} parent=1 // pred_check_branch
      %20 = sbr.rel (0) target = $region13
    $region12: #{tpu_custom_call.1} parent=1 // pred_region
      _
    $region13: #{tpu_custom_call.1} parent=1 // pred_fallthru
      _
    // Predicated region
    $region14: #{tpu_custom_call.1} parent=1 // pred_check
      _
    $region15: #{tpu_custom_call.1} parent=1 // pred_check_branch
      %22 = sbr.rel (0) target = $region17
    $region16: #{tpu_custom_call.1} parent=1 // pred_region
      _
    $region17: #{tpu_custom_call.1} parent=1 // pred_fallthru
      _
    // Predicated region
    $region18: #{tpu_custom_call.1} parent=1 // pred_check
      _
    $region19: #{tpu_custom_call.1} parent=1 // pred_check_branch
      %24 = sbr.rel (0) target = $region21
    $region20: #{tpu_custom_call.1} parent=1 // pred_region
      _
    $region21: #{tpu_custom_call.1} parent=1 // pred_fallthru
      _
    // Predicated region
    $region22: #{tpu_custom_call.1} parent=1 // pred_check
      _
    $region23: #{tpu_custom_call.1} parent=1 // pred_check_branch
      %26 = sbr.rel (0) target = $region25
    $region24: #{tpu_custom_call.1} parent=1 // pred_region
      _
    $region25: #{tpu_custom_call.1} parent=1 // pred_fallthru
      _
    // Predicated region
    $region26: #{tpu_custom_call.1} parent=1 // pred_check
      _
    $region27: #{tpu_custom_call.1} parent=1 // pred_check_branch
      %28 = sbr.rel (0) target = $region29
    $region28: #{tpu_custom_call.1} parent=1 // pred_region
      _
    $region29: #{tpu_custom_call.1} parent=1 // pred_fallthru
      _
    %v30 = vld [vmem:[%s0] sm:$0xff]
    %v31 = vld [vmem:[%s0 + $0x8] sm:$0xff]
    %v32 = vld [vmem:[%s0 + $0x10] sm:$0xff]
    %v33 = vld [vmem:[%s0 + $0x18] sm:$0xff]
    %v34 = vld [vmem:[%s0 + $0x20] sm:$0xff]
    %v35 = vld [vmem:[%s0 + $0x28] sm:$0xff]
    %v36 = vld [vmem:[%s0 + $0x30] sm:$0xff]
    %v37 = vld [vmem:[%s0 + $0x38] sm:$0xff]
    %v38 = vld [vmem:[%s0 + $0x40] sm:$0xff]
    %v39 = vld [vmem:[%s0 + $0x48] sm:$0xff]
    %v40 = vld [vmem:[%s0 + $0x50] sm:$0xff]
    %v41 = vld [vmem:[%s0 + $0x58] sm:$0xff]
    %v42 = vld [vmem:[%s0 + $0x60] sm:$0xff]
    %v43 = vld [vmem:[%s0 + $0x68] sm:$0xff]
    %v44 = vld [vmem:[%s0 + $0x70] sm:$0xff]
    %v45 = vld [vmem:[%s0 + $0x78] sm:$0xff]
    %46 = vxpose.xlu0.b32.start [1/16] %v30, 128
    %47 = vxpose.xlu0.b32.cont [2/16] %v31, 128
    %48 = vxpose.xlu0.b32.cont [3/16] %v32, 128
    %49 = vxpose.xlu0.b32.cont [4/16] %v33, 128
    %50 = vxpose.xlu0.b32.cont [5/16] %v34, 128
    %51 = vxpose.xlu0.b32.cont [6/16] %v35, 128
    %52 = vxpose.xlu0.b32.cont [7/16] %v36, 128
    %53 = vxpose.xlu0.b32.cont [8/16] %v37, 128
    %54 = vxpose.xlu0.b32.cont [9/16] %v38, 128
    %55 = vxpose.xlu0.b32.cont [10/16] %v39, 128
    %56 = vxpose.xlu0.b32.cont [11/16] %v40, 128
    %57 = vxpose.xlu0.b32.cont [12/16] %v41, 128
    %58 = vxpose.xlu0.b32.cont [13/16] %v42, 128
    %59 = vxpose.xlu0.b32.cont [14/16] %v43, 128
    %60 = vxpose.xlu0.b32.cont [15/16] %v44, 128
    %61 = vxpose.xlu0.b32.end [16/16] %v45, 128
    %v62 = vpop.trf.xlu0
    %v63 = vpop.trf.xlu0
    %v64 = vpop.trf.xlu0
    %v65 = vpop.trf.xlu0
    %v66 = vpop.trf.xlu0
    %v67 = vpop.trf.xlu0
    %v68 = vpop.trf.xlu0
    %v69 = vpop.trf.xlu0
    %v70 = vpop.trf.xlu0
    %v71 = vpop.trf.xlu0
    %v72 = vpop.trf.xlu0
    %v73 = vpop.trf.xlu0
    %v74 = vpop.trf.xlu0
    %v75 = vpop.trf.xlu0
    %v76 = vpop.trf.xlu0
    %v77 = vpop.trf.xlu0
    %v78 = vpack.c.bf16 %v63, %v62
    %v79 = vld [vmem:[%s1] sm:$0xf]
    %v80 = vld [vmem:[%s1 + $0x4] sm:$0xf]
    %v81 = vld [vmem:[%s1 + $0x8] sm:$0xf]
    %v82 = vld [vmem:[%s1 + $0xc] sm:$0xf]
    %v83 = vld [vmem:[%s1 + $0x10] sm:$0xf]
    %v84 = vld [vmem:[%s1 + $0x14] sm:$0xf]
    %v85 = vld [vmem:[%s1 + $0x18] sm:$0xf]
    %v86 = vld [vmem:[%s1 + $0x1c] sm:$0xf]
    %v87 = vld [vmem:[%s2] sm:$0xff]
    %v88 = vld [vmem:[%s2 + $0x8] sm:$0xff]
    %v89 = vld [vmem:[%s2 + $0x10] sm:$0xff]
    %v90 = vld [vmem:[%s2 + $0x18] sm:$0xff]
    %v91 = vld [vmem:[%s2 + $0x20] sm:$0xff]
    %v92 = vld [vmem:[%s2 + $0x28] sm:$0xff]
    %v93 = vld [vmem:[%s2 + $0x30] sm:$0xff]
    %v94 = vld [vmem:[%s2 + $0x38] sm:$0xff]
    %96 = vset.pattern.permute.xlu0 0
    %97 = vperm.xlu0 %96, %v87
    %v98 = vpop.permute.xlu0 %97
    %101 = vset.pattern.permute.xlu0 0
    %102 = vperm.xlu0 %101, %v88
    %v103 = vpop.permute.xlu0 %102
    %106 = vset.pattern.permute.xlu0 0
    %107 = vperm.xlu0 %106, %v89
    %v108 = vpop.permute.xlu0 %107
    %111 = vset.pattern.permute.xlu0 0
    %112 = vperm.xlu0 %111, %v90
    %v113 = vpop.permute.xlu0 %112
    %116 = vset.pattern.permute.xlu0 0
    %117 = vperm.xlu0 %116, %v91
    %v118 = vpop.permute.xlu0 %117
    %121 = vset.pattern.permute.xlu0 0
    %122 = vperm.xlu0 %121, %v92
    %v123 = vpop.permute.xlu0 %122
    %126 = vset.pattern.permute.xlu0 0
    %127 = vperm.xlu0 %126, %v93
    %v128 = vpop.permute.xlu0 %127
    %131 = vset.pattern.permute.xlu0 0
    %132 = vperm.xlu0 %131, %v94
    %v133 = vpop.permute.xlu0 %132
    %v143 = vunpack.c.l.b16 %v79
    %v144 = vunpack.c.l.b16 %v80
    %v145 = vunpack.c.l.b16 %v81
    %v146 = vunpack.c.l.b16 %v82
    %v147 = vunpack.c.l.b16 %v83
    %v148 = vunpack.c.l.b16 %v84
    %v149 = vunpack.c.l.b16 %v85
    %v150 = vunpack.c.l.b16 %v86
    %v151 = vpack.c.b16 %v144, %v143
    %v152 = vpack.c.b16 %v146, %v145
    %v153 = vpack.c.b16 %v148, %v147
    %v154 = vpack.c.b16 %v150, %v149
    %vm155 = vcmask 130048
    %v157 = vsel %vm155, %v151, 0
    %v160 = vsel %vm155, %v152, 0
    %v163 = vsel %vm155, %v153, 0
    %v166 = vsel %vm155, %v154, 0
    %168 = vmatprep.subr.bf16.mxu0 0
    %169 = vmatpush1.bf16.msra.mxu0 0
    %170 = vmatprep.subr.bf16.mxu0 0
    %171 = vmatpush1.bf16.msra.mxu0 0
    %172 = vmatprep.subr.bf16.mxu0 0
    %173 = vmatpush1.bf16.msra.mxu0 0
    %174 = vmatprep.subr.bf16.mxu0 0
    %175 = vmatpush1.bf16.msra.mxu0 0
    %176 = vmatprep.subr.bf16.mxu0 0
    %177 = vmatpush1.bf16.msra.mxu0 0
    %178 = vmatprep.subr.bf16.mxu0 0
    %179 = vmatpush1.bf16.msra.mxu0 0
    %180 = vmatprep.subr.bf16.mxu0 0
    %181 = vmatpush1.bf16.msra.mxu0 0
    %182 = vmatprep.subr.bf16.mxu0 0
    %183 = vmatpush1.bf16.msra.mxu0 %v78
    %184 = vmatprep.subr.bf16.mxu0 0
    %185 = vmatpush2.bf16.msra.mxu0 0
    %186 = vmatprep.subr.bf16.mxu0 0
    %187 = vmatpush2.bf16.msra.mxu0 0
    %188 = vmatprep.subr.bf16.mxu0 0
    %189 = vmatpush2.bf16.msra.mxu0 0
    %190 = vmatprep.subr.bf16.mxu0 0
    %191 = vmatpush2.bf16.msra.mxu0 0
    %192 = vmatprep.subr.bf16.mxu0 0
    %193 = vmatpush2.bf16.msra.mxu0 0
    %194 = vmatprep.subr.bf16.mxu0 0
    %195 = vmatpush2.bf16.msra.mxu0 0
    %196 = vmatprep.subr.bf16.mxu0 0
    %197 = vmatpush2.bf16.msra.mxu0 0
    %198 = vmatprep.subr.bf16.mxu0 0
    %199 = vmatpush2.bf16.msra.mxu0 0
    %200 = vmatprep.mubr.bf16.mxu0 0
    %201 = vmatmul.mubr.bf16.gmra.mxu0 %v157
    %v202 = vpop.f32.mrf.mxu0
    %v203 = vadd.f32 %v98, %v202
    %v204 = vpop.f32.mrf.mxu0
    %v205 = vpop.f32.mrf.mxu0
    %v206 = vadd.f32 %v103, %v205
    %v207 = vpop.f32.mrf.mxu0
    %208 = vmatprep.mubr.bf16.mxu0 0
    %209 = vmatmul.mubr.bf16.gmra.mxu0 %v160
    %v210 = vpop.f32.mrf.mxu0
    %v211 = vadd.f32 %v108, %v210
    %v212 = vpop.f32.mrf.mxu0
    %v213 = vpop.f32.mrf.mxu0
    %v214 = vadd.f32 %v113, %v213
    %v215 = vpop.f32.mrf.mxu0
    %216 = vmatprep.mubr.bf16.mxu0 0
    %217 = vmatmul.mubr.bf16.gmra.mxu0 %v163
    %v218 = vpop.f32.mrf.mxu0
    %v219 = vadd.f32 %v118, %v218
    %v220 = vpop.f32.mrf.mxu0
    %v221 = vpop.f32.mrf.mxu0
    %v222 = vadd.f32 %v123, %v221
    %v223 = vpop.f32.mrf.mxu0
    %224 = vmatprep.mubr.bf16.mxu0 0
    %225 = vmatmul.mubr.bf16.gmra.mxu0 %v166
    %v226 = vpop.f32.mrf.mxu0
    %v227 = vadd.f32 %v128, %v226
    %v228 = vpop.f32.mrf.mxu0
    %v229 = vpop.f32.mrf.mxu0
    %v230 = vadd.f32 %v133, %v229
    %v231 = vpop.f32.mrf.mxu0
    %232 = vdwg.mxu0
    %v233 = vmax.f32 %v203, 0.0
    %v234 = vmax.f32 %v206, 0.0
    %v235 = vmax.f32 %v211, 0.0
    %v236 = vmax.f32 %v214, 0.0
    %v237 = vmax.f32 %v219, 0.0
    %v238 = vmax.f32 %v222, 0.0
    %v239 = vmax.f32 %v227, 0.0
    %v240 = vmax.f32 %v230, 0.0
    %v241 = vld [vmem:[%s3] sm:$0xf]
    %v242 = vld [vmem:[%s3 + $0x4] sm:$0xf]
    %v243 = vld [vmem:[%s3 + $0x8] sm:$0xf]
    %v244 = vld [vmem:[%s3 + $0xc] sm:$0xf]
    %v245 = vpack.c.bf16 %v234, %v233
    %v246 = vpack.c.bf16 %v236, %v235
    %v247 = vpack.c.bf16 %v238, %v237
    %v248 = vpack.c.bf16 %v240, %v239
    %v249 = vld [vmem:[%s4] sm:$0xff]
    %v250 = vld [vmem:[%s4 + $0x8] sm:$0xff]
    %v251 = vld [vmem:[%s4 + $0x10] sm:$0xff]
    %v252 = vld [vmem:[%s4 + $0x18] sm:$0xff]
    %254 = vset.pattern.permute.xlu0 0
    %255 = vperm.xlu0 %254, %v249
    %v256 = vpop.permute.xlu0 %255
    %259 = vset.pattern.permute.xlu0 0
    %260 = vperm.xlu0 %259, %v250
    %v261 = vpop.permute.xlu0 %260
    %264 = vset.pattern.permute.xlu0 0
    %265 = vperm.xlu0 %264, %v251
    %v266 = vpop.permute.xlu0 %265
    %269 = vset.pattern.permute.xlu0 0
    %270 = vperm.xlu0 %269, %v252
    %v271 = vpop.permute.xlu0 %270
    %v277 = vunpack.c.l.b16 %v241
    %v278 = vunpack.c.l.b16 %v242
    %v279 = vunpack.c.l.b16 %v243
    %v280 = vunpack.c.l.b16 %v244
    %v281 = vpack.c.b16 %v278, %v277
    %v282 = vpack.c.b16 %v280, %v279
    %vm283 = vcmask 523264
    %v285 = vsel %vm283, %v281, 0
    %v288 = vsel %vm283, %v282, 0
    %290 = vmatprep.subr.bf16.mxu0 0
    %291 = vmatpush1.bf16.msra.mxu0 0
    %292 = vmatprep.subr.bf16.mxu0 0
    %293 = vmatpush1.bf16.msra.mxu0 0
    %294 = vmatprep.subr.bf16.mxu0 0
    %295 = vmatpush1.bf16.msra.mxu0 0
    %296 = vmatprep.subr.bf16.mxu0 0
    %297 = vmatpush1.bf16.msra.mxu0 0
    %298 = vmatprep.subr.bf16.mxu0 0
    %299 = vmatpush1.bf16.msra.mxu0 %v248
    %300 = vmatprep.subr.bf16.mxu0 0
    %301 = vmatpush1.bf16.msra.mxu0 %v247
    %302 = vmatprep.subr.bf16.mxu0 0
    %303 = vmatpush1.bf16.msra.mxu0 %v246
    %304 = vmatprep.subr.bf16.mxu0 0
    %305 = vmatpush1.bf16.msra.mxu0 %v245
    %306 = vmatprep.subr.bf16.mxu0 0
    %307 = vmatpush2.bf16.msra.mxu0 0
    %308 = vmatprep.subr.bf16.mxu0 0
    %309 = vmatpush2.bf16.msra.mxu0 0
    %310 = vmatprep.subr.bf16.mxu0 0
    %311 = vmatpush2.bf16.msra.mxu0 0
    %312 = vmatprep.subr.bf16.mxu0 0
    %313 = vmatpush2.bf16.msra.mxu0 0
    %314 = vmatprep.subr.bf16.mxu0 0
    %315 = vmatpush2.bf16.msra.mxu0 0
    %316 = vmatprep.subr.bf16.mxu0 0
    %317 = vmatpush2.bf16.msra.mxu0 0
    %318 = vmatprep.subr.bf16.mxu0 0
    %319 = vmatpush2.bf16.msra.mxu0 0
    %320 = vmatprep.subr.bf16.mxu0 0
    %321 = vmatpush2.bf16.msra.mxu0 0
    %322 = vmatprep.mubr.bf16.mxu0 0
    %323 = vmatmul.mubr.bf16.gmra.mxu0 %v285
    %v324 = vpop.f32.mrf.mxu0
    %v325 = vadd.f32 %v256, %v324
    %v326 = vpop.f32.mrf.mxu0
    %v327 = vpop.f32.mrf.mxu0
    %v328 = vadd.f32 %v261, %v327
    %v329 = vpop.f32.mrf.mxu0
    %330 = vmatprep.mubr.bf16.mxu0 0
    %331 = vmatmul.mubr.bf16.gmra.mxu0 %v288
    %v332 = vpop.f32.mrf.mxu0
    %v333 = vadd.f32 %v266, %v332
    %v334 = vpop.f32.mrf.mxu0
    %v335 = vpop.f32.mrf.mxu0
    %v336 = vadd.f32 %v271, %v335
    %v337 = vpop.f32.mrf.mxu0
    %338 = vdwg.mxu0
    %v339 = vmax.f32 %v325, 0.0
    %v340 = vmax.f32 %v328, 0.0
    %v341 = vmax.f32 %v333, 0.0
    %v342 = vmax.f32 %v336, 0.0
    %v343 = vld [vmem:[%s5] sm:$0x1]
    %v344 = vpack.c.bf16 %v340, %v339
    %v345 = vpack.c.bf16 %v342, %v341
    %v346 = vld [vmem:[#allocation2] sm:$0x1]
    %348 = vset.pattern.permute.xlu0 0
    %349 = vperm.xlu0 %348, %v346
    %v350 = vpop.permute.xlu0 %349
    %v352 = vlaneseq
    %v353 = vshrl.u32 %v352, 7
    %v354 = vsub.s32 0, %v353
    %v355 = vrot.slane %v350, %v354
    %vm356 = vcmask 261120
    %v358 = vsel %vm356, %v343, 0
    %360 = vmatprep.subr.bf16.mxu0 0
    %361 = vmatpush1.bf16.msra.mxu0 0
    %362 = vmatprep.subr.bf16.mxu0 0
    %363 = vmatpush1.bf16.msra.mxu0 0
    %364 = vmatprep.subr.bf16.mxu0 0
    %365 = vmatpush1.bf16.msra.mxu0 0
    %366 = vmatprep.subr.bf16.mxu0 0
    %367 = vmatpush1.bf16.msra.mxu0 0
    %368 = vmatprep.subr.bf16.mxu0 0
    %369 = vmatpush1.bf16.msra.mxu0 0
    %370 = vmatprep.subr.bf16.mxu0 0
    %371 = vmatpush1.bf16.msra.mxu0 0
    %372 = vmatprep.subr.bf16.mxu0 0
    %373 = vmatpush1.bf16.msra.mxu0 %v345
    %374 = vmatprep.subr.bf16.mxu0 0
    %375 = vmatpush1.bf16.msra.mxu0 %v344
    %376 = vmatprep.subr.bf16.mxu0 0
    %377 = vmatpush2.bf16.msra.mxu0 0
    %378 = vmatprep.subr.bf16.mxu0 0
    %379 = vmatpush2.bf16.msra.mxu0 0
    %380 = vmatprep.subr.bf16.mxu0 0
    %381 = vmatpush2.bf16.msra.mxu0 0
    %382 = vmatprep.subr.bf16.mxu0 0
    %383 = vmatpush2.bf16.msra.mxu0 0
    %384 = vmatprep.subr.bf16.mxu0 0
    %385 = vmatpush2.bf16.msra.mxu0 0
    %386 = vmatprep.subr.bf16.mxu0 0
    %387 = vmatpush2.bf16.msra.mxu0 0
    %388 = vmatprep.subr.bf16.mxu0 0
    %389 = vmatpush2.bf16.msra.mxu0 0
    %390 = vmatprep.subr.bf16.mxu0 0
    %391 = vmatpush2.bf16.msra.mxu0 0
    %392 = vmatprep.mubr.bf16.mxu0 0
    %393 = vmatmul.mubr.bf16.gmra.mxu0 %v358
    %v394 = vpop.f32.mrf.mxu0
    %v395 = vadd.f32 %v355, %v394
    %v396 = vpop.f32.mrf.mxu0
    %v397 = vpop.f32.mrf.mxu0
    %v398 = vpop.f32.mrf.mxu0
    %399 = vdwg.mxu0
    %v400 = vxor.u32 %v395, 2147483648
    %v401 = vmul.f32 %v400, 1.442695
    %v402 = vpow.pop %v401
    %v403 = vadd.f32 %v402, 1.0
    %v404 = vrcp.pop %v403
    %v405 = vmul.f32 1.0, %v404
    %406 = vst [vmem:[#allocation3] sm:$0x1] %v405
    // Predicated region
    $region30: #{tpu_custom_call.1} parent=1 // pred_check
      _
    $region31: #{tpu_custom_call.1} parent=1 // pred_check_branch
      %408 = sbr.rel (0) target = $region33
    $region32: #{tpu_custom_call.1} parent=1 // pred_region
      %s410 = ssub.s32 16, 16
      %411 = vsyncadd [#allocation4], %s410
      %s413 = sshll.u32 [#allocation3], 4
      %s414 = int_to_ptr.vmem [resolvable:$true] %s413
      %416 = dma.vmem_to_hbm [thread:$0]  %s414, 16, %s7, [#allocation4]
    $region33: #{tpu_custom_call.1} parent=1 // pred_fallthru
      _
    // Predicated region
    $region34: #{tpu_custom_call.1} parent=1 // pred_check
      _
    $region35: #{tpu_custom_call.1} parent=1 // pred_check_branch
      %418 = sbr.rel (0) target = $region37
    $region36: #{tpu_custom_call.1} parent=1 // pred_region
      %419 = dma.done [#allocation4], 16
    $region37: #{tpu_custom_call.1} parent=1 // pred_fallthru
      _
    %420 = vsyncpa [#allocation4], 1

</llo_original>
